<compile_context>
chip_gen: v7x
topology: tpu7x:2x2x1
jax: 0.10.0
libtpu: 0.0.40
codegen_flags: <defaults>
</compile_context>

<pallas_src>
import jax
import jax.numpy as jnp
import numpy as np
from jax.experimental import pallas as pl
from jax.experimental.pallas import tpu as pltpu


def _round_up(x, m):
    return (x + m - 1) // m * m


def _make_kernel(C, v_tile):
    def kernel(pred_ref, label_ref, counts_out_ref, nll_out_ref, counts_acc, nll_acc):
        t = pl.program_id(1)  # inner ("arbitrary") tile axis

        @pl.when(t == 0)
        def _init():
            counts_acc[...] = jnp.zeros_like(counts_acc)
            nll_acc[...] = jnp.zeros_like(nll_acc)

        pred = pred_ref[...].astype(jnp.float32)   # (C, v_tile), upcast in-kernel only
        label = label_ref[...]                     # (1, v_tile) int32; pad columns = -1

        # bool one-hot mask (no float one-hot, no int materialization kept live)
        class_ids = jax.lax.broadcasted_iota(jnp.int32, (C, v_tile), 0)
        mask = class_ids == label                  # (C, v_tile) bool

        # numerically-stable log-sum-exp over the (small) class/sublane axis
        m = jnp.max(pred, axis=0, keepdims=True)                               # (1, v_tile)
        lse = m + jnp.log(jnp.sum(jnp.exp(pred - m), axis=0, keepdims=True))   # (1, v_tile)
        tgt = jnp.sum(jnp.where(mask, pred, 0.0), axis=0, keepdims=True)       # (1, v_tile)
        nll = lse - tgt                                                        # (1, v_tile)

        # per-class, lane-wise accumulators (pure VPU adds; reduced once in wrapper)
        counts_acc[...] += mask.astype(jnp.float32)
        nll_acc[...] += jnp.where(mask, nll, 0.0)

        # store only on the last inner step (partial per-part outputs)
        @pl.when(t == pl.num_programs(1) - 1)
        def _finalize():
            counts_out_ref[...] = counts_acc[...]
            nll_out_ref[...] = nll_acc[...]

    return kernel


def my_criterion(pred, label, num_classes, *, v_tile=1024, n_parts=2):
    """pred: (V, num_classes) float (any dtype), label: (V,) int -> scalar f32 loss."""
    V, C = pred.shape
    assert C == num_classes

    # lane tile: multiple of 128, no wider than the padded sample count
    v_tile = max(128, _round_up(min(v_tile, _round_up(V, 128)), 128))
    n_tiles = (V + v_tile - 1) // v_tile
    n_parts = max(1, min(n_parts, n_tiles))
    tiles_per_part = (n_tiles + n_parts - 1) // n_parts
    v_pad = n_parts * tiles_per_part * v_tile

    # lane-dense layout: classes on sublanes, samples on lanes; native dtype (no f32 cast)
    pred_t = pred.T                                      # (C, V)
    label_row = label.astype(jnp.int32).reshape(1, V)    # (1, V)
    pad = v_pad - V
    if pad:
        pred_t = jnp.pad(pred_t, ((0, 0), (0, pad)))
        label_row = jnp.pad(label_row, ((0, 0), (0, pad)), constant_values=-1)

    kernel = _make_kernel(C, v_tile)
    counts_out, nll_out = pl.pallas_call(
        kernel,
        out_shape=(
            jax.ShapeDtypeStruct((n_parts, C, v_tile), jnp.float32),
            jax.ShapeDtypeStruct((n_parts, C, v_tile), jnp.float32),
        ),
        grid_spec=pltpu.PrefetchScalarGridSpec(
            num_scalar_prefetch=0,
            grid=(n_parts, tiles_per_part),
            in_specs=[
                pl.BlockSpec((C, v_tile), lambda p, t: (0, p * tiles_per_part + t)),
                pl.BlockSpec((1, v_tile), lambda p, t: (0, p * tiles_per_part + t)),
            ],
            out_specs=(
                pl.BlockSpec((None, C, v_tile), lambda p, t: (p, 0, 0)),
                pl.BlockSpec((None, C, v_tile), lambda p, t: (p, 0, 0)),
            ),
            scratch_shapes=[
                pltpu.VMEM((C, v_tile), jnp.float32),
                pltpu.VMEM((C, v_tile), jnp.float32),
            ],
        ),
        compiler_params=pltpu.CompilerParams(
            dimension_semantics=("parallel", "arbitrary"),
            vmem_limit_bytes=32 * 1024 * 1024,
        ),
    )(pred_t, label_row)

    # tiny finalize on per-part partials (global class counts -> weights -> weighted mean)
    counts = jnp.sum(counts_out, axis=(0, 2))      # (C,)
    nll_sum = jnp.sum(nll_out, axis=(0, 2))        # (C,)
    v_f = jnp.float32(V)
    weight = ((v_f - counts) / v_f) * (counts > 0).astype(jnp.float32)
    num = jnp.sum(weight * nll_sum)
    den = jnp.sum(weight * counts)
    # NOTE: den == 0 (all samples in one class) yields 0/0 = NaN, same as torch.
    return num / den


def _reference(pred, label, num_classes):
    """Pure-JAX reference mirroring torch CrossEntropyLoss(weight=...) semantics."""
    V = pred.shape[0]
    counts = jnp.sum(jax.nn.one_hot(label, num_classes, dtype=jnp.float32), axis=0)
    weight = ((V - counts) / V) * (counts > 0).astype(jnp.float32)
    logp = jax.nn.log_softmax(pred.astype(jnp.float32), axis=-1)
    nll = -jnp.take_along_axis(logp, label[:, None], axis=-1)[:, 0]
    w_i = weight[label]
    return jnp.sum(w_i * nll) / jnp.sum(w_i)


if __name__ == "__main__":
    num_classes = 16
    V = 300  # not a multiple of the tile -> exercises padding + multi-tile accumulation
    key = jax.random.PRNGKey(0)
    kp, kl = jax.random.split(key)
    pred = jax.random.normal(kp, (V, num_classes), dtype=jnp.float32)
    # labels drawn from a subset of classes so some cluster_sizes are 0
    label = jax.random.randint(kl, (V,), 0, num_classes - 4, dtype=jnp.int32)

    # small tile so the (2 parts x 2 tiles) grid path is exercised at this tiny V
    loss = my_criterion(pred, label, num_classes, v_tile=128)
    loss = jax.block_until_ready(loss)

    ref = jax.block_until_ready(_reference(pred, label, num_classes))
    assert np.allclose(np.asarray(loss), np.asarray(ref), rtol=1e-5, atol=1e-5), (
        f"mismatch: pallas={loss} ref={ref}"
    )
    print("KERNEL_OK")
</pallas_src>

<mosaic_0001>
module attributes {stable_mosaic.version = 11 : i64} {
  func.func @kernel(%arg0: i32, %arg1: i32, %arg2: memref<16x128xf32, #tpu.memory_space<vmem>>, %arg3: memref<1x128xi32, #tpu.memory_space<vmem>>, %arg4: memref<1x16x128xf32, #tpu.memory_space<vmem>>, %arg5: memref<1x16x128xf32, #tpu.memory_space<vmem>>, %arg6: memref<16x128xf32, #tpu.memory_space<vmem>>, %arg7: memref<16x128xf32, #tpu.memory_space<vmem>>) attributes {dimension_semantics = [#tpu.dimension_semantics<parallel>, #tpu.dimension_semantics<arbitrary>], iteration_bounds = array<i64: 2, 2>, scalar_prefetch = 0 : i64, scratch_operands = 2 : i64, tpu.core_type = #tpu.core_type<tc>, window_params = [{transform_indices = @transform_0, window_bounds = array<i64: 16, 128>}, {transform_indices = @transform_1, window_bounds = array<i64: 1, 128>}, {transform_indices = @transform_2, window_bounds = array<i64: 1, 16, 128>}, {transform_indices = @transform_3, window_bounds = array<i64: 1, 16, 128>}]} {
    %c0_i32 = arith.constant 0 : i32
    %0 = arith.cmpi eq, %arg1, %c0_i32 : i32
    %1 = arith.extui %0 : i1 to i32
    %c0_i32_0 = arith.constant 0 : i32
    %2 = arith.cmpi ne, %1, %c0_i32_0 : i32
    scf.if %2 {
      %cst_17 = arith.constant 0.000000e+00 : f32
      %37 = vector.broadcast %cst_17 : f32 to vector<16x128xf32>
      %c0_18 = arith.constant 0 : index
      %c0_19 = arith.constant 0 : index
      %38 = vector.load %arg6[%c0_18, %c0_19] : memref<16x128xf32, #tpu.memory_space<vmem>>, vector<16x128xf32>
      tpu.vector_store %arg6[%c0_18, %c0_19], %37 {strides = array<i32>} : memref<16x128xf32, #tpu.memory_space<vmem>>, vector<16x128xf32>,
      %cst_20 = arith.constant 0.000000e+00 : f32
      %39 = vector.broadcast %cst_20 : f32 to vector<16x128xf32>
      %c0_21 = arith.constant 0 : index
      %c0_22 = arith.constant 0 : index
      %40 = vector.load %arg7[%c0_21, %c0_22] : memref<16x128xf32, #tpu.memory_space<vmem>>, vector<16x128xf32>
      tpu.vector_store %arg7[%c0_21, %c0_22], %39 {strides = array<i32>} : memref<16x128xf32, #tpu.memory_space<vmem>>, vector<16x128xf32>,
    } else {
    }
    %c0 = arith.constant 0 : index
    %c0_1 = arith.constant 0 : index
    %3 = vector.load %arg2[%c0, %c0_1] : memref<16x128xf32, #tpu.memory_space<vmem>>, vector<16x128xf32>
    %c0_2 = arith.constant 0 : index
    %c0_3 = arith.constant 0 : index
    %4 = vector.load %arg3[%c0_2, %c0_3] : memref<1x128xi32, #tpu.memory_space<vmem>>, vector<1x128xi32>
    %5 = tpu.iota {dimensions = array<i32: 0>} : vector<16x128xi32>
    %6 = vector.broadcast %4 : vector<1x128xi32> to vector<16x128xi32>
    %7 = arith.cmpi eq, %5, %6 : vector<16x128xi32>
    %cst = arith.constant dense<0xFF800000> : vector<128xf32>
    %8 = vector.multi_reduction <maximumf>, %3, %cst [0] : vector<16x128xf32> to vector<128xf32>
    %9 = vector.shape_cast %8 : vector<128xf32> to vector<1x128xf32>
    %10 = vector.broadcast %9 : vector<1x128xf32> to vector<16x128xf32>
    %11 = arith.subf %3, %10 : vector<16x128xf32>
    %12 = math.exp %11 : vector<16x128xf32>
    %cst_4 = arith.constant dense<0.000000e+00> : vector<128xf32>
    %13 = vector.multi_reduction <add>, %12, %cst_4 [0] : vector<16x128xf32> to vector<128xf32>
    %14 = vector.shape_cast %13 : vector<128xf32> to vector<1x128xf32>
    %15 = math.log %14 : vector<1x128xf32>
    %16 = arith.addf %9, %15 : vector<1x128xf32>
    %cst_5 = arith.constant 0.000000e+00 : f32
    %17 = vector.broadcast %cst_5 : f32 to vector<16x128xf32>
    %18 = arith.select %7, %3, %17 : vector<16x128xi1>, vector<16x128xf32>
    %cst_6 = arith.constant dense<0.000000e+00> : vector<128xf32>
    %19 = vector.multi_reduction <add>, %18, %cst_6 [0] : vector<16x128xf32> to vector<128xf32>
    %20 = vector.shape_cast %19 : vector<128xf32> to vector<1x128xf32>
    %21 = arith.subf %16, %20 : vector<1x128xf32>
    %c0_7 = arith.constant 0 : index
    %c0_8 = arith.constant 0 : index
    %22 = vector.load %arg6[%c0_7, %c0_8] : memref<16x128xf32, #tpu.memory_space<vmem>>, vector<16x128xf32>
    %23 = arith.extui %7 : vector<16x128xi1> to vector<16x128xi32>
    %24 = arith.sitofp %23 : vector<16x128xi32> to vector<16x128xf32>
    %25 = arith.addf %22, %24 : vector<16x128xf32>
    %c0_9 = arith.constant 0 : index
    %c0_10 = arith.constant 0 : index
    %26 = vector.load %arg6[%c0_9, %c0_10] : memref<16x128xf32, #tpu.memory_space<vmem>>, vector<16x128xf32>
    tpu.vector_store %arg6[%c0_9, %c0_10], %25 {strides = array<i32>} : memref<16x128xf32, #tpu.memory_space<vmem>>, vector<16x128xf32>,
    %c0_11 = arith.constant 0 : index
    %c0_12 = arith.constant 0 : index
    %27 = vector.load %arg7[%c0_11, %c0_12] : memref<16x128xf32, #tpu.memory_space<vmem>>, vector<16x128xf32>
    %cst_13 = arith.constant 0.000000e+00 : f32
    %28 = vector.shape_cast %21 : vector<1x128xf32> to vector<1x128xf32>
    %29 = vector.broadcast %28 : vector<1x128xf32> to vector<16x128xf32>
    %30 = vector.broadcast %cst_13 : f32 to vector<16x128xf32>
    %31 = arith.select %7, %29, %30 : vector<16x128xi1>, vector<16x128xf32>
    %32 = arith.addf %27, %31 : vector<16x128xf32>
    %c0_14 = arith.constant 0 : index
    %c0_15 = arith.constant 0 : index
    %33 = vector.load %arg7[%c0_14, %c0_15] : memref<16x128xf32, #tpu.memory_space<vmem>>, vector<16x128xf32>
    tpu.vector_store %arg7[%c0_14, %c0_15], %32 {strides = array<i32>} : memref<16x128xf32, #tpu.memory_space<vmem>>, vector<16x128xf32>,
    %c1_i32 = arith.constant 1 : i32
    %34 = arith.cmpi eq, %arg1, %c1_i32 : i32
    %35 = arith.extui %34 : i1 to i32
    %c0_i32_16 = arith.constant 0 : i32
    %36 = arith.cmpi ne, %35, %c0_i32_16 : i32
    scf.if %36 {
      %c0_17 = arith.constant 0 : index
      %c0_18 = arith.constant 0 : index
      %37 = vector.load %arg6[%c0_17, %c0_18] : memref<16x128xf32, #tpu.memory_space<vmem>>, vector<16x128xf32>
      %c0_19 = arith.constant 0 : index
      %c0_20 = arith.constant 0 : index
      %c0_21 = arith.constant 0 : index
      %38 = vector.load %arg4[%c0_19, %c0_20, %c0_21] : memref<1x16x128xf32, #tpu.memory_space<vmem>>, vector<1x16x128xf32>
      %39 = vector.shape_cast %38 : vector<1x16x128xf32> to vector<16x128xf32>
      %40 = vector.shape_cast %37 : vector<16x128xf32> to vector<1x16x128xf32>
      tpu.vector_store %arg4[%c0_19, %c0_20, %c0_21], %40 {strides = array<i32>} : memref<1x16x128xf32, #tpu.memory_space<vmem>>, vector<1x16x128xf32>,
      %c0_22 = arith.constant 0 : index
      %c0_23 = arith.constant 0 : index
      %41 = vector.load %arg7[%c0_22, %c0_23] : memref<16x128xf32, #tpu.memory_space<vmem>>, vector<16x128xf32>
      %c0_24 = arith.constant 0 : index
      %c0_25 = arith.constant 0 : index
      %c0_26 = arith.constant 0 : index
      %42 = vector.load %arg5[%c0_24, %c0_25, %c0_26] : memref<1x16x128xf32, #tpu.memory_space<vmem>>, vector<1x16x128xf32>
      %43 = vector.shape_cast %42 : vector<1x16x128xf32> to vector<16x128xf32>
      %44 = vector.shape_cast %41 : vector<16x128xf32> to vector<1x16x128xf32>
      tpu.vector_store %arg5[%c0_24, %c0_25, %c0_26], %44 {strides = array<i32>} : memref<1x16x128xf32, #tpu.memory_space<vmem>>, vector<1x16x128xf32>,
    } else {
    }
    return
  }
  func.func @transform_0(%arg0: i32, %arg1: i32) -> (i32, i32) {
    %c2_i32 = arith.constant 2 : i32
    %0 = arith.muli %arg0, %c2_i32 : i32
    %1 = arith.addi %0, %arg1 : i32
    %c0_i32 = arith.constant 0 : i32
    %c0_i32_0 = arith.constant 0 : i32
    return %c0_i32, %1 : i32, i32
  }
  func.func @transform_1(%arg0: i32, %arg1: i32) -> (i32, i32) {
    %c2_i32 = arith.constant 2 : i32
    %0 = arith.muli %arg0, %c2_i32 : i32
    %1 = arith.addi %0, %arg1 : i32
    %c0_i32 = arith.constant 0 : i32
    %c0_i32_0 = arith.constant 0 : i32
    return %c0_i32, %1 : i32, i32
  }
  func.func @transform_2(%arg0: i32, %arg1: i32) -> (i32, i32, i32) {
    %c0_i32 = arith.constant 0 : i32
    %c0_i32_0 = arith.constant 0 : i32
    %c0_i32_1 = arith.constant 0 : i32
    return %arg0, %c0_i32, %c0_i32_0 : i32, i32, i32
  }
  func.func @transform_3(%arg0: i32, %arg1: i32) -> (i32, i32, i32) {
    %c0_i32 = arith.constant 0 : i32
    %c0_i32_0 = arith.constant 0 : i32
    %c0_i32_1 = arith.constant 0 : i32
    return %arg0, %c0_i32, %c0_i32_0 : i32, i32, i32
  }
}

</mosaic_0001>

<llo_original>
// kernel: tpu_custom_call.1
$region0: #{tpu_custom_call.1}
  #allocation0 [shape = 'u32[]', space=smem, size = 0x4, offset = 0x4, fixed_abs, tag = 'smem constant byte address 0x4 - core index']
  #allocation1 [shape = 'u32[144,128]{1,0:T(1,128)}', space=vmem, size = 0x12000, scoped, tag = 'internal scratch']
  #allocation2 [shape = 'f32[16,128]{1,0:T(8,128)}', space=vmem, size = 0x2000, scoped, tag = 'scratch operand']
  #allocation3 [shape = 'f32[16,128]{1,0:T(8,128)}', space=vmem, size = 0x2000, scoped, tag = 'scratch operand']
  %s0 = inlined_call_operand.hbm [shape: f32[16,512], index: 0, kind: input, shape index: {}]
  %s1 = inlined_call_operand.hbm [shape: s32[1,512], index: 1, kind: input, shape index: {}]
  %s2 = inlined_call_operand.hbm [shape: f32[2,16,128], index: 2, kind: output, shape index: {0}]
  %s3 = inlined_call_operand.hbm [shape: f32[2,16,128], index: 3, kind: output, shape index: {1}]
  %4 = xla_tuple %s2, %s3
  %s5 = sld [smem:[#allocation0]]
  $region65: #{tpu_custom_call.1} parent=0
    _
  %s7 = ssub.s32 1, %s5
  %s8 = scalar_select 0, %s7, %s5
  $region1: #{tpu_custom_call.1} parent=0
    #allocation4 [shape = 'u8[16384]{0}', space=vmem, size = 0x4000, scoped, tag = 'input window, operand 0']
    #allocation5 [shape = 's32[2]{0}', space=sflag, size = 0x8, scoped, tag = 'scoped memory for tpu_custom_call.1']
    #allocation6 [shape = 's32[2]{0}', space=sflag, size = 0x8, scoped, tag = 'scoped memory for tpu_custom_call.1']
    #allocation7 [shape = 'u8[1024]{0}', space=vmem, size = 0x400, scoped, tag = 'input window, operand 1']
    #allocation8 [shape = 's32[2]{0}', space=sflag, size = 0x8, scoped, tag = 'scoped memory for tpu_custom_call.1']
    #allocation9 [shape = 'u8[16384]{0}', space=vmem, size = 0x4000, scoped, tag = 'output window, operand 0']
    #allocation10 [shape = 'u8[16384]{0}', space=vmem, size = 0x4000, scoped, tag = 'output window, operand 1']
    #allocation11 [shape = 's32[2]{0}', space=sflag, size = 0x8, scoped, tag = 'scoped memory for tpu_custom_call.1']
    %9 = vsyncpa [#allocation5], 0
    %s10 = scalar_lea.sflag [#allocation5], 1
    %11 = vsyncpa %s10, 0
    %12 = vsyncpa [#allocation8], 0
    %s13 = scalar_lea.sflag [#allocation8], 1
    %14 = vsyncpa %s13, 0
    %15 = vsyncpa [#allocation6], 0
    %s16 = scalar_lea.sflag [#allocation6], 1
    %17 = vsyncpa %s16, 0
    %18 = vsyncpa [#allocation11], 0
    %s19 = scalar_lea.sflag [#allocation11], 1
    %20 = vsyncpa %s19, 0
    loop: start=0, step=1, limit=6
    $region2: #{tpu_custom_call.1} parent=1 // loop_pre_header
      _
    $region3: #{tpu_custom_call.1} parent=1 // loop_header
      %s22 = sphi 0, %s26
      %p23 = scmp.ge.s32.totalorder %s22, 6
      %s29 = sphi 0, %s41
      %s30 = sphi 0, %s37
      %s31 = sphi 0, %s29
      %s32 = sphi 0, %s30
      %s33 = sphi 0, %s31
      %s34 = sphi 0, %s32
      %s48 = sphi 0, %s50
      %s51 = sphi 0, %s48
      %s52 = sphi 0, %s51
      %s68 = sphi 0, %s52
      %s78 = sphi 0, %s80
      %s81 = sphi 0, %s78
      %s82 = sphi 0, %s81
      %s98 = sphi 0, %s82
      %s104 = sphi 0, %s106
      %s107 = sphi 0, %s104
      %s108 = sphi 0, %s107
      %s124 = sphi 0, %s108
      %s130 = sphi 0, %s132
      %s133 = sphi 0, %s130
      %s134 = sphi 0, %s133
      %s150 = sphi 0, %s134
    $region4: #{tpu_custom_call.1} parent=1 // loop_header_branch
      %25 = sbr.rel (%p23) target = $region8
    $region5: #{tpu_custom_call.1} parent=1 // loop_body
      %s27 = ssub.s32 %s22, 1
      %s28 = ssub.s32 %s22, 2
      %s35 = sadd.s32 1, %s30
      %p36 = scmp.ge.s32.totalorder %s35, 2
      %s37 = scalar_select %p36, 0, %s35
      %s38 = sadd.s32 1, %s29
      %s39 = scalar_select %p36, %s38, %s29
      %p40 = scmp.ge.s32.totalorder %s39, 2
      %s41 = scalar_select %p40, 0, %s39
      %s42 = smul.u32 %s29, 2
      %s43 = sadd.s32 %s42, %s30
      %s44 = smul.u32 %s41, 2
      %s45 = sadd.s32 %s44, %s37
      %s46 = ssub.s32 %s43, %s45
      %p47 = scmp.eq.s32.totalorder %s46, 0
      %s49 = sadd.s32 %s48, 1
      %s50 = scalar_select %p47, %s48, %s49
      %p53 = pneg %p47
      %p54 = scmp.eq.s32.totalorder %s22, 3
      %p55 = por %p53, %p54
      %p56 = scmp.ne.s32.totalorder %s48, %s51
      %p57 = scmp.eq.s32.totalorder %s22, 0
      %p58 = por %p56, %p57
      %p59 = scmp.ne.s32.totalorder %s48, %s51
      %p60 = scmp.eq.s32.totalorder %s27, 3
      %p61 = por %p59, %p60
      %p62 = scmp.ne.s32.totalorder %s51, %s52
      %p63 = scmp.eq.s32.totalorder %s27, 0
      %p64 = por %p62, %p63
      %p65 = scmp.ne.s32.totalorder %s51, %s52
      %p66 = scmp.eq.s32.totalorder %s28, 3
      %p67 = por %p65, %p66
      %p69 = scmp.ne.s32.totalorder %s52, %s68
      %p70 = scmp.eq.s32.totalorder %s28, 0
      %p71 = por %p69, %p70
      %s72 = smul.u32 %s29, 2
      %s73 = sadd.s32 %s72, %s30
      %s74 = smul.u32 %s41, 2
      %s75 = sadd.s32 %s74, %s37
      %s76 = ssub.s32 %s73, %s75
      %p77 = scmp.eq.s32.totalorder %s76, 0
      %s79 = sadd.s32 %s78, 1
      %s80 = scalar_select %p77, %s78, %s79
      %p83 = pneg %p77
      %p84 = scmp.eq.s32.totalorder %s22, 3
      %p85 = por %p83, %p84
      %p86 = scmp.ne.s32.totalorder %s78, %s81
      %p87 = scmp.eq.s32.totalorder %s22, 0
      %p88 = por %p86, %p87
      %p89 = scmp.ne.s32.totalorder %s78, %s81
      %p90 = scmp.eq.s32.totalorder %s27, 3
      %p91 = por %p89, %p90
      %p92 = scmp.ne.s32.totalorder %s81, %s82
      %p93 = scmp.eq.s32.totalorder %s27, 0
      %p94 = por %p92, %p93
      %p95 = scmp.ne.s32.totalorder %s81, %s82
      %p96 = scmp.eq.s32.totalorder %s28, 3
      %p97 = por %p95, %p96
      %p99 = scmp.ne.s32.totalorder %s82, %s98
      %p100 = scmp.eq.s32.totalorder %s28, 0
      %p101 = por %p99, %p100
      %s102 = ssub.s32 %s29, %s41
      %p103 = scmp.eq.s32.totalorder %s102, 0
      %s105 = sadd.s32 %s104, 1
      %s106 = scalar_select %p103, %s104, %s105
      %p109 = pneg %p103
      %p110 = scmp.eq.s32.totalorder %s22, 3
      %p111 = por %p109, %p110
      %p112 = scmp.ne.s32.totalorder %s104, %s107
      %p113 = scmp.eq.s32.totalorder %s22, 0
      %p114 = por %p112, %p113
      %p115 = scmp.ne.s32.totalorder %s104, %s107
      %p116 = scmp.eq.s32.totalorder %s27, 3
      %p117 = por %p115, %p116
      %p118 = scmp.ne.s32.totalorder %s107, %s108
      %p119 = scmp.eq.s32.totalorder %s27, 0
      %p120 = por %p118, %p119
      %p121 = scmp.ne.s32.totalorder %s107, %s108
      %p122 = scmp.eq.s32.totalorder %s28, 3
      %p123 = por %p121, %p122
      %p125 = scmp.ne.s32.totalorder %s108, %s124
      %p126 = scmp.eq.s32.totalorder %s28, 0
      %p127 = por %p125, %p126
      %s128 = ssub.s32 %s29, %s41
      %p129 = scmp.eq.s32.totalorder %s128, 0
      %s131 = sadd.s32 %s130, 1
      %s132 = scalar_select %p129, %s130, %s131
      %p135 = pneg %p129
      %p136 = scmp.eq.s32.totalorder %s22, 3
      %p137 = por %p135, %p136
      %p138 = scmp.ne.s32.totalorder %s130, %s133
      %p139 = scmp.eq.s32.totalorder %s22, 0
      %p140 = por %p138, %p139
      %p141 = scmp.ne.s32.totalorder %s130, %s133
      %p142 = scmp.eq.s32.totalorder %s27, 3
      %p143 = por %p141, %p142
      %p144 = scmp.ne.s32.totalorder %s133, %s134
      %p145 = scmp.eq.s32.totalorder %s27, 0
      %p146 = por %p144, %p145
      %p147 = scmp.ne.s32.totalorder %s133, %s134
      %p148 = scmp.eq.s32.totalorder %s28, 3
      %p149 = por %p147, %p148
      %p151 = scmp.ne.s32.totalorder %s134, %s150
      %p152 = scmp.eq.s32.totalorder %s28, 0
      %p153 = por %p151, %p152
      %p154 = scmp.le.s32.totalorder 1, %s22
      %p155 = scmp.lt.s32.totalorder %s22, 5
      %p156 = pnand %p154, %p155
      %p157 = pneg %p156
      // Predicated region
      $region9: #{tpu_custom_call.1} parent=5 // pred_check
        _
      $region10: #{tpu_custom_call.1} parent=5 // pred_check_branch
        %159 = sbr.rel (%p156) target = $region12
      $region11: #{tpu_custom_call.1} parent=5 // pred_region
        %s160 = ssub.s32 %s22, 1
      $region12: #{tpu_custom_call.1} parent=5 // pred_fallthru
        _
      %p161 = scmp.lt.s32.totalorder %s22, 4
      // Predicated region
      $region13: #{tpu_custom_call.1} parent=5 // pred_check
        %p162 = pneg %p161
      $region14: #{tpu_custom_call.1} parent=5 // pred_check_branch
        %164 = sbr.rel (%p162) target = $region16
      $region15: #{tpu_custom_call.1} parent=5 // pred_region
        // Predicated region
        $region17: #{tpu_custom_call.1} parent=15 // pred_check
          %p165 = pneg %p58
        $region18: #{tpu_custom_call.1} parent=15 // pred_check_branch
          %167 = sbr.rel (%p165) target = $region20
        $region19: #{tpu_custom_call.1} parent=15 // pred_region
          %s168 = sand.u32 %s48, 1
          %s169 = scalar_lea.sflag [#allocation5], %s168
          %s170 = sand.u32 %s48, 1
          %s171 = smul.addr %s170, 16
          %s172 = scalar_lea.vmem [#allocation4], %s171
          %s173 = smul.u32 %s29, 2
          %s174 = sadd.s32 %s173, %s30
          %s176 = ssub.s32 256, 256
          %177 = vsyncadd %s169, %s176
          %s178 = smul.addr %s174, 128
          %s179 = scalar_lea.hbm %s0, %s178
          %s180 = sshll.u32 %s172, 4
          %s181 = int_to_ptr.vmem [resolvable:$true] %s180
          %186 = dma.hbm_to_vmem [thread:$0]  %s179, 256, %s181, %s169, 512, 128, 8
        $region20: #{tpu_custom_call.1} parent=15 // pred_fallthru
          _
        // Predicated region
        $region21: #{tpu_custom_call.1} parent=15 // pred_check
          %p187 = pneg %p88
        $region22: #{tpu_custom_call.1} parent=15 // pred_check_branch
          %189 = sbr.rel (%p187) target = $region24
        $region23: #{tpu_custom_call.1} parent=15 // pred_region
          %s190 = sand.u32 %s78, 1
          %s191 = scalar_lea.sflag [#allocation8], %s190
          %s192 = sand.u32 %s78, 1
          %s193 = scalar_lea.vmem [#allocation7], %s192
          %s194 = smul.u32 %s29, 2
          %s195 = sadd.s32 %s194, %s30
          %s197 = ssub.s32 16, 16
          %198 = vsyncadd %s191, %s197
          %s199 = smul.addr %s195, 16
          %s200 = scalar_lea.hbm %s1, %s199
          %s202 = sshll.u32 %s193, 4
          %s203 = int_to_ptr.vmem [resolvable:$true] %s202
          %205 = dma.hbm_to_vmem [thread:$0]  %s200, 16, %s203, %s191
        $region24: #{tpu_custom_call.1} parent=15 // pred_fallthru
          _
      $region16: #{tpu_custom_call.1} parent=5 // pred_fallthru
        _
      %p206 = scmp.le.s32.totalorder 1, %s22
      %p207 = scmp.lt.s32.totalorder %s22, 5
      %p208 = pnand %p206, %p207
      %p209 = pneg %p208
      // Predicated region
      $region25: #{tpu_custom_call.1} parent=5 // pred_check
        _
      $region26: #{tpu_custom_call.1} parent=5 // pred_check_branch
        %211 = sbr.rel (%p208) target = $region28
      $region27: #{tpu_custom_call.1} parent=5 // pred_region
        %s212 = ssub.s32 %s22, 1
        %s213 = sand.u32 %s51, 1
        %s214 = scalar_lea.sflag [#allocation5], %s213
        %s215 = sand.u32 %s51, 1
        %s216 = smul.addr %s215, 16
        %s217 = scalar_lea.vmem [#allocation4], %s216
        // Predicated region
        $region29: #{tpu_custom_call.1} parent=27 // pred_check
          %p218 = pneg %p64
        $region30: #{tpu_custom_call.1} parent=27 // pred_check_branch
          %220 = sbr.rel (%p218) target = $region32
        $region31: #{tpu_custom_call.1} parent=27 // pred_region
          %221 = dma.done %s214, 256
        $region32: #{tpu_custom_call.1} parent=27 // pred_fallthru
          _
        %s222 = sand.u32 %s81, 1
        %s223 = scalar_lea.sflag [#allocation8], %s222
        %s224 = sand.u32 %s81, 1
        %s225 = scalar_lea.vmem [#allocation7], %s224
        // Predicated region
        $region33: #{tpu_custom_call.1} parent=27 // pred_check
          %p226 = pneg %p94
        $region34: #{tpu_custom_call.1} parent=27 // pred_check_branch
          %228 = sbr.rel (%p226) target = $region36
        $region35: #{tpu_custom_call.1} parent=27 // pred_region
          %229 = dma.done %s223, 16
        $region36: #{tpu_custom_call.1} parent=27 // pred_fallthru
          _
        %s230 = sand.u32 %s51, 1
        %s231 = scalar_lea.sflag [#allocation5], %s230
        %s232 = sand.u32 %s51, 1
        %s233 = smul.addr %s232, 16
        %s234 = scalar_lea.vmem [#allocation4], %s233
        %p235 = pneg %p64
        %p236 = pneg %p61
        %s237 = sand.u32 %s81, 1
        %s238 = scalar_lea.sflag [#allocation8], %s237
        %s239 = sand.u32 %s81, 1
        %s240 = scalar_lea.vmem [#allocation7], %s239
        %p241 = pneg %p94
        %p242 = pneg %p91
        %p243 = pneg %p120
        %p244 = pneg %p117
        %s245 = sand.u32 %s107, 1
        %s246 = scalar_lea.sflag [#allocation6], %s245
        %s247 = sand.u32 %s107, 1
        %s248 = smul.addr %s247, 16
        %s249 = scalar_lea.vmem [#allocation9], %s248
        %p250 = pneg %p146
        %p251 = pneg %p143
        %s252 = sand.u32 %s133, 1
        %s253 = scalar_lea.sflag [#allocation11], %s252
        %s254 = sand.u32 %s133, 1
        %s255 = smul.addr %s254, 16
        %s256 = scalar_lea.vmem [#allocation10], %s255
        %s257 = smul.u32 %s31, 2
        %s258 = sadd.s32 %s257, %s32
        %s259 = smul.u32 %s31, 2
        %s260 = sadd.s32 %s259, %s32
        %p261 = scmp.eq.s32.totalorder %s32, 0
        // Predicated region
        $region37: #{tpu_custom_call.1} parent=27 // pred_check
          %p262 = pneg %p261
        $region38: #{tpu_custom_call.1} parent=27 // pred_check_branch
          %264 = sbr.rel (%p262) target = $region40
        $region39: #{tpu_custom_call.1} parent=27 // pred_region
          %265 = vst [vmem:[#allocation2] sm:$0xff] 0.0
          %266 = vst [vmem:[#allocation2 + $0x8] sm:$0xff] 0.0
          %267 = vst [vmem:[#allocation3] sm:$0xff] 0.0
          %268 = vst [vmem:[#allocation3 + $0x8] sm:$0xff] 0.0
        $region40: #{tpu_custom_call.1} parent=27 // pred_fallthru
          _
        %v269 = vld [vmem:[%s217] sm:$0xff]
        %v270 = vld [vmem:[%s217 + $0x8] sm:$0xff]
        %v271 = vld [vmem:[%s225] sm:$0x1]
        %v272 = vlaneseq
        %v273 = vshrl.u32 %v272, 7
        %v274 = vadd.s32 %v273, 8
        %v275 = vlaneseq
        %v276 = vshrl.u32 %v275, 7
        %v277 = vsub.s32 0, %v276
        %v278 = vrot.slane %v271, %v277
        %vm279 = vcmp.eq.s32.totalorder %v273, %v278
        %vm280 = vcmp.eq.s32.totalorder %v274, %v278
        %v281 = vmax.f32 %v269, %v270
        %v282 = vrot.slane %v281, 4
        %v283 = vmax.f32 %v281, %v282
        %v284 = vrot.slane %v283, 2
        %v285 = vmax.f32 %v283, %v284
        %v286 = vrot.slane %v285, 1
        %v287 = vmax.f32 %v285, %v286
        %v288 = vsub.f32 %v269, %v287
        %v289 = vsub.f32 %v270, %v287
        %v290 = vmul.f32 %v288, 1.442695
        %v291 = vpow.pop %v290
        %v292 = vmul.f32 %v289, 1.442695
        %v293 = vpow.pop %v292
        %v294 = vadd.f32 %v291, %v293
        %v295 = vrot.slane %v294, 4
        %v296 = vadd.f32 %v294, %v295
        %v297 = vrot.slane %v296, 2
        %v298 = vadd.f32 %v296, %v297
        %v299 = vrot.slane %v298, 1
        %v300 = vadd.f32 %v298, %v299
        %v301 = vlog2.pop %v300
        %v302 = vmul.f32 %v301, 0.6931472
        %v303 = vadd.f32 %v287, %v302
        %v304 = vsel %vm279, %v269, 0.0
        %v305 = vsel %vm280, %v270, 0.0
        %v306 = vadd.f32 %v304, %v305
        %v307 = vrot.slane %v306, 4
        %v308 = vadd.f32 %v306, %v307
        %v309 = vrot.slane %v308, 2
        %v310 = vadd.f32 %v308, %v309
        %v311 = vrot.slane %v310, 1
        %v312 = vadd.f32 %v310, %v311
        %v313 = vsub.f32 %v303, %v312
        %v314 = vld [vmem:[#allocation2] sm:$0xff]
        %v315 = vld [vmem:[#allocation2 + $0x8] sm:$0xff]
        %v316 = vsel %vm279, 1, 0
        %v317 = vsel %vm280, 1, 0
        %v318 = vcvt.s32.f32 %v316
        %v319 = vcvt.s32.f32 %v317
        %v320 = vadd.f32 %v314, %v318
        %v321 = vadd.f32 %v315, %v319
        %322 = vst [vmem:[#allocation2] sm:$0xff] %v320
        %323 = vst [vmem:[#allocation2 + $0x8] sm:$0xff] %v321
        %v324 = vld [vmem:[#allocation3] sm:$0xff]
        %v325 = vld [vmem:[#allocation3 + $0x8] sm:$0xff]
        %v326 = vsel %vm279, %v313, 0.0
        %v327 = vsel %vm280, %v313, 0.0
        %v328 = vadd.f32 %v324, %v326
        %v329 = vadd.f32 %v325, %v327
        %330 = vst [vmem:[#allocation3] sm:$0xff] %v328
        %331 = vst [vmem:[#allocation3 + $0x8] sm:$0xff] %v329
        %p332 = scmp.eq.s32.totalorder %s32, 1
        // Predicated region
        $region41: #{tpu_custom_call.1} parent=27 // pred_check
          %p333 = pneg %p332
        $region42: #{tpu_custom_call.1} parent=27 // pred_check_branch
          %335 = sbr.rel (%p333) target = $region44
        $region43: #{tpu_custom_call.1} parent=27 // pred_region
          %v336 = vld [vmem:[#allocation2] sm:$0xff]
          %v337 = vld [vmem:[#allocation2 + $0x8] sm:$0xff]
          %338 = vst [vmem:[%s249] sm:$0xff] %v336
          %339 = vst [vmem:[%s249 + $0x8] sm:$0xff] %v337
          %v340 = vld [vmem:[#allocation3] sm:$0xff]
          %v341 = vld [vmem:[#allocation3 + $0x8] sm:$0xff]
          %342 = vst [vmem:[%s256] sm:$0xff] %v340
          %343 = vst [vmem:[%s256 + $0x8] sm:$0xff] %v341
        $region44: #{tpu_custom_call.1} parent=27 // pred_fallthru
          _
        %s344 = sand.u32 %s107, 1
        %s345 = scalar_lea.sflag [#allocation6], %s344
        %s346 = sand.u32 %s107, 1
        %s347 = smul.addr %s346, 16
        %s348 = scalar_lea.vmem [#allocation9], %s347
        %s349 = sand.u32 %s133, 1
        %s350 = scalar_lea.sflag [#allocation11], %s349
        %s351 = sand.u32 %s133, 1
        %s352 = smul.addr %s351, 16
        %s353 = scalar_lea.vmem [#allocation10], %s352
        // Predicated region
        $region45: #{tpu_custom_call.1} parent=27 // pred_check
          %p354 = pneg %p117
        $region46: #{tpu_custom_call.1} parent=27 // pred_check_branch
          %356 = sbr.rel (%p354) target = $region48
        $region47: #{tpu_custom_call.1} parent=27 // pred_region
          %s358 = ssub.s32 256, 256
          %359 = vsyncadd %s345, %s358
          %s360 = smul.addr %s31, 2
          %s361 = smul.addr %s360, 128
          %s362 = scalar_lea.hbm %s2, %s361
          %s363 = sshll.u32 %s348, 4
          %s364 = int_to_ptr.vmem [resolvable:$true] %s363
          %369 = dma.vmem_to_hbm [thread:$0]  %s364, 256, %s362, %s345, 128, 128, 8
        $region48: #{tpu_custom_call.1} parent=27 // pred_fallthru
          _
        // Predicated region
        $region49: #{tpu_custom_call.1} parent=27 // pred_check
          %p370 = pneg %p143
        $region50: #{tpu_custom_call.1} parent=27 // pred_check_branch
          %372 = sbr.rel (%p370) target = $region52
        $region51: #{tpu_custom_call.1} parent=27 // pred_region
          %s374 = ssub.s32 256, 256
          %375 = vsyncadd %s350, %s374
          %s376 = smul.addr %s31, 2
          %s377 = smul.addr %s376, 128
          %s378 = scalar_lea.hbm %s3, %s377
          %s379 = sshll.u32 %s353, 4
          %s380 = int_to_ptr.vmem [resolvable:$true] %s379
          %385 = dma.vmem_to_hbm [thread:$0]  %s380, 256, %s378, %s350, 128, 128, 8
        $region52: #{tpu_custom_call.1} parent=27 // pred_fallthru
          _
      $region28: #{tpu_custom_call.1} parent=5 // pred_fallthru
        _
      %p386 = scmp.le.s32.totalorder 2, %s22
      // Predicated region
      $region53: #{tpu_custom_call.1} parent=5 // pred_check
        %p387 = pneg %p386
      $region54: #{tpu_custom_call.1} parent=5 // pred_check_branch
        %389 = sbr.rel (%p387) target = $region56
      $region55: #{tpu_custom_call.1} parent=5 // pred_region
        %s390 = ssub.s32 %s22, 2
        // Predicated region
        $region57: #{tpu_custom_call.1} parent=55 // pred_check
          %p391 = pneg %p123
        $region58: #{tpu_custom_call.1} parent=55 // pred_check_branch
          %393 = sbr.rel (%p391) target = $region60
        $region59: #{tpu_custom_call.1} parent=55 // pred_region
          %s394 = sand.u32 %s108, 1
          %s395 = scalar_lea.sflag [#allocation6], %s394
          %s396 = sand.u32 %s108, 1
          %s397 = smul.addr %s396, 16
          %s398 = scalar_lea.vmem [#allocation9], %s397
          %399 = dma.done %s395, 256
        $region60: #{tpu_custom_call.1} parent=55 // pred_fallthru
          _
        // Predicated region
        $region61: #{tpu_custom_call.1} parent=55 // pred_check
          %p400 = pneg %p149
        $region62: #{tpu_custom_call.1} parent=55 // pred_check_branch
          %402 = sbr.rel (%p400) target = $region64
        $region63: #{tpu_custom_call.1} parent=55 // pred_region
          %s403 = sand.u32 %s134, 1
          %s404 = scalar_lea.sflag [#allocation11], %s403
          %s405 = sand.u32 %s134, 1
          %s406 = smul.addr %s405, 16
          %s407 = scalar_lea.vmem [#allocation10], %s406
          %408 = dma.done %s404, 256
        $region64: #{tpu_custom_call.1} parent=55 // pred_fallthru
          _
      $region56: #{tpu_custom_call.1} parent=5 // pred_fallthru
        _
    $region6: #{tpu_custom_call.1} parent=1 // loop_footer
      %s26 = sadd.s32 1, %s22
    $region7: #{tpu_custom_call.1} parent=1 // loop_footer_branch
      %21 = sbr.rel target = $region3
    $region8: #{tpu_custom_call.1} parent=1 // loop_exit
      _
    %409 = vsyncpa [#allocation5], 1
    %s410 = scalar_lea.sflag [#allocation5], 1
    %411 = vsyncpa %s410, 1
    %412 = vsyncpa [#allocation8], 1
    %s413 = scalar_lea.sflag [#allocation8], 1
    %414 = vsyncpa %s413, 1
    %415 = vsyncpa [#allocation6], 1
    %s416 = scalar_lea.sflag [#allocation6], 1
    %417 = vsyncpa %s416, 1
    %418 = vsyncpa [#allocation11], 1
    %s419 = scalar_lea.sflag [#allocation11], 1
    %420 = vsyncpa %s419, 1

</llo_original>
